<compile_context>
chip_gen: v5e
topology: v5e:2x2
jax: 0.10.0
libtpu: 0.0.40
codegen_flags: <defaults>
</compile_context>

<pallas_src>
import functools

import jax
import jax.numpy as jnp
from jax import lax
from jax.experimental import pallas as pl
from jax.experimental.pallas import tpu as pltpu


def _make_shortcut_kernel(c_in, pad, wo):
    def kernel(x_ref, o_ref):
        # x_ref: (Bt, C, Ho, 2*W) -- last axis = [even-H-row cols 0..W-1 | odd-H-row cols]
        # o_ref: (Bt, C_out, Ho, Wo)
        bt, c, ho, two_w = x_ref.shape

        # Collapse leading dims (pure retiling: Ho sits on the sublane axis and is a
        # multiple of 8 for the resnet.py shortcut shapes) so the stride-2 column pick
        # becomes a single rank-2 matmul against a 0/1 selection matrix.
        lhs = x_ref[...].reshape(bt * c * ho, two_w).astype(jnp.float32)

        # sel[w, j] = 1.0 iff w == 2*j.  Since 2*j < W, columns w >= W (the odd H row
        # packed on the same axis) are never selected, so this picks even columns of
        # even rows in one shot.  Exact arithmetic (0/1 weights in f32).
        w_ids = lax.broadcasted_iota(jnp.int32, (two_w, wo), 0)
        j_ids = lax.broadcasted_iota(jnp.int32, (two_w, wo), 1)
        sel = (w_ids == 2 * j_ids).astype(jnp.float32)

        sub = jnp.dot(lhs, sel, preferred_element_type=jnp.float32)
        sub = sub.reshape(bt, c, ho, wo).astype(o_ref.dtype)

        # Interior channels written exactly once; only the pad ranges get zero stores.
        o_ref[:, pad:pad + c_in, :, :] = sub
        if pad > 0:
            zeros = jnp.zeros((bt, pad, ho, wo), o_ref.dtype)
            o_ref[:, :pad, :, :] = zeros
            o_ref[:, pad + c_in:, :, :] = zeros

    return kernel


def _choose_num_steps(batch, per_image_vmem_bytes, vmem_budget_bytes=16 * 1024 * 1024):
    """Fewest, fattest grid steps whose double-buffered footprint fits the budget;
    minimum of 2 steps when batch >= 2 so both v7x TensorCores are used."""
    min_steps = 2 if batch >= 2 else 1
    for n in range(min_steps, batch + 1):
        if batch % n == 0 and (batch // n) * per_image_vmem_bytes <= vmem_budget_bytes:
            return n
    return batch


def lambda_shortcut_forward(x, *, planes):
    """Pallas equivalent of
       F.pad(x[:, :, ::2, ::2], (0, 0, 0, 0, planes//4, planes//4), 'constant', 0)

    x: (B, C, H, W) NCHW.  Returns NCHW (B, C + 2*(planes//4), H//2, W//2).
    """
    B, C, H, W = x.shape
    assert H % 2 == 0 and W % 2 == 0, "stride-2 shortcut expects even spatial dims"
    Ho, Wo = H // 2, W // 2
    P = planes // 4
    C_out = C + 2 * P

    # Free metadata reshape (row-major): pack each (even row, odd row) pair of W
    # columns onto the last axis.  No transpose, no data movement.
    x_pk = x.reshape(B, C, Ho, 2 * W)

    itemsize = jnp.dtype(x.dtype).itemsize
    in_bytes = B * C * H * W * itemsize
    out_bytes = B * C_out * Ho * Wo * itemsize
    per_image = 2 * (C * H * W + C_out * Ho * Wo) * itemsize   # 2x = double buffering
    n_steps = _choose_num_steps(B, per_image)
    Bt = B // n_steps

    return pl.pallas_call(
        _make_shortcut_kernel(C, P, Wo),
        out_shape=jax.ShapeDtypeStruct((B, C_out, Ho, Wo), x.dtype),
        grid_spec=pltpu.PrefetchScalarGridSpec(
            num_scalar_prefetch=0,
            grid=(n_steps,),
            in_specs=[pl.BlockSpec((Bt, C, Ho, 2 * W), lambda b: (b, 0, 0, 0))],
            out_specs=pl.BlockSpec((Bt, C_out, Ho, Wo), lambda b: (b, 0, 0, 0)),
        ),
        compiler_params=pltpu.CompilerParams(
            dimension_semantics=("parallel",),
        ),
        cost_estimate=pl.CostEstimate(
            flops=2 * B * C * Ho * (2 * W) * Wo,   # the tiny selection matmul
            transcendentals=0,
            bytes_accessed=in_bytes + out_bytes,
        ),
    )(x_pk)


if __name__ == "__main__":
    # resnet.py option-A shortcut at the 16 -> 32 plane transition, CIFAR-ish size.
    B, C, H, W = 2, 16, 16, 16
    planes = 32                                    # pad = planes // 4 = 8 per side

    key = jax.random.PRNGKey(0)
    x = jax.random.normal(key, (B, C, H, W), jnp.float32)

    fwd = jax.jit(functools.partial(lambda_shortcut_forward, planes=planes))
    out = jax.block_until_ready(fwd(x))

    # Reference: pure-JAX replica of the torch lambda.
    P = planes // 4
    ref = jnp.pad(x[:, :, ::2, ::2], ((0, 0), (P, P), (0, 0), (0, 0)))

    assert out.shape == (B, C + 2 * P, H // 2, W // 2)
    assert jnp.allclose(out, ref)

    print("KERNEL_OK")
</pallas_src>

<mosaic_0001>
module attributes {stable_mosaic.version = 11 : i64} {
  func.func @kernel(%arg0: i32, %arg1: memref<1x16x8x32xf32, #tpu.memory_space<vmem>>, %arg2: memref<1x32x8x8xf32, #tpu.memory_space<vmem>>) attributes {dimension_semantics = [#tpu.dimension_semantics<parallel>], iteration_bounds = array<i64: 2>, scalar_prefetch = 0 : i64, scratch_operands = 0 : i64, tpu.core_type = #tpu.core_type<tc>, window_params = [{transform_indices = @transform_0, window_bounds = array<i64: 1, 16, 8, 32>}, {transform_indices = @transform_1, window_bounds = array<i64: 1, 32, 8, 8>}]} {
    %c0 = arith.constant 0 : index
    %c0_0 = arith.constant 0 : index
    %c0_1 = arith.constant 0 : index
    %c0_2 = arith.constant 0 : index
    %0 = vector.load %arg1[%c0, %c0_0, %c0_1, %c0_2] : memref<1x16x8x32xf32, #tpu.memory_space<vmem>>, vector<1x16x8x32xf32>
    %1 = vector.shape_cast %0 : vector<1x16x8x32xf32> to vector<128x32xf32>
    %2 = tpu.iota {dimensions = array<i32: 0>} : vector<32x8xi32>
    %3 = tpu.iota {dimensions = array<i32: 1>} : vector<32x8xi32>
    %c2_i32 = arith.constant 2 : i32
    %4 = vector.broadcast %c2_i32 : i32 to vector<32x8xi32>
    %5 = arith.muli %4, %3 : vector<32x8xi32>
    %6 = arith.cmpi eq, %2, %5 : vector<32x8xi32>
    %7 = arith.extui %6 : vector<32x8xi1> to vector<32x8xi32>
    %8 = arith.sitofp %7 : vector<32x8xi32> to vector<32x8xf32>
    %cst = arith.constant dense<0.000000e+00> : vector<128x8xf32>
    %9 = tpu.matmul %1, %8, %cst {dimension_numbers = #tpu.dot_dimension_numbers<[1], [0], [0], [1], [0, 0, 1, 1], [], []>} : vector<128x32xf32>, vector<32x8xf32>, vector<128x8xf32> -> vector<128x8xf32>
    %10 = vector.shape_cast %9 : vector<128x8xf32> to vector<1x16x8x8xf32>
    %c0_3 = arith.constant 0 : index
    %c8 = arith.constant 8 : index
    %c0_4 = arith.constant 0 : index
    %c0_5 = arith.constant 0 : index
    %11 = vector.load %arg2[%c0_3, %c8, %c0_4, %c0_5] : memref<1x32x8x8xf32, #tpu.memory_space<vmem>>, vector<1x16x8x8xf32>
    tpu.vector_store %arg2[%c0_3, %c8, %c0_4, %c0_5], %10 {strides = array<i32>} : memref<1x32x8x8xf32, #tpu.memory_space<vmem>>, vector<1x16x8x8xf32>,
    %cst_6 = arith.constant 0.000000e+00 : f32
    %12 = vector.broadcast %cst_6 : f32 to vector<1x8x8x8xf32>
    %c0_7 = arith.constant 0 : index
    %c0_8 = arith.constant 0 : index
    %c0_9 = arith.constant 0 : index
    %c0_10 = arith.constant 0 : index
    %13 = vector.load %arg2[%c0_7, %c0_8, %c0_9, %c0_10] : memref<1x32x8x8xf32, #tpu.memory_space<vmem>>, vector<1x8x8x8xf32>
    tpu.vector_store %arg2[%c0_7, %c0_8, %c0_9, %c0_10], %12 {strides = array<i32>} : memref<1x32x8x8xf32, #tpu.memory_space<vmem>>, vector<1x8x8x8xf32>,
    %c0_11 = arith.constant 0 : index
    %c24 = arith.constant 24 : index
    %c0_12 = arith.constant 0 : index
    %c0_13 = arith.constant 0 : index
    %14 = vector.load %arg2[%c0_11, %c24, %c0_12, %c0_13] : memref<1x32x8x8xf32, #tpu.memory_space<vmem>>, vector<1x8x8x8xf32>
    tpu.vector_store %arg2[%c0_11, %c24, %c0_12, %c0_13], %12 {strides = array<i32>} : memref<1x32x8x8xf32, #tpu.memory_space<vmem>>, vector<1x8x8x8xf32>,
    return
  }
  func.func @transform_0(%arg0: i32) -> (i32, i32, i32, i32) {
    %c0_i32 = arith.constant 0 : i32
    %c0_i32_0 = arith.constant 0 : i32
    %c0_i32_1 = arith.constant 0 : i32
    %c0_i32_2 = arith.constant 0 : i32
    return %arg0, %c0_i32, %c0_i32_0, %c0_i32_1 : i32, i32, i32, i32
  }
  func.func @transform_1(%arg0: i32) -> (i32, i32, i32, i32) {
    %c0_i32 = arith.constant 0 : i32
    %c0_i32_0 = arith.constant 0 : i32
    %c0_i32_1 = arith.constant 0 : i32
    %c0_i32_2 = arith.constant 0 : i32
    return %arg0, %c0_i32, %c0_i32_0, %c0_i32_1 : i32, i32, i32, i32
  }
}

</mosaic_0001>

<llo_original>
// kernel: lambda_shortcut_forward.1
$region0: #{lambda_shortcut_forward.1}
  #allocation0 [shape = 'u32[]', space=smem, size = 0x4, offset = 0x4, fixed_abs, tag = 'smem constant byte address 0x4 - core index']
  #allocation1 [shape = 'u32[72,128]{1,0:T(1,128)}', space=vmem, size = 0x9000, scoped, tag = 'internal scratch']
  %s0 = inlined_call_operand.vmem [shape: f32[2,16,8,32], index: 0, kind: input, shape index: {}]
  %s1 = inlined_call_operand.vmem [shape: f32[2,32,8,8], index: 1, kind: output, shape index: {}]
  %s2 = sld [smem:[#allocation0]]
  $region37: #{lambda_shortcut_forward.1} parent=0
    _
  %s4 = ssub.s32 1, %s2
  %s5 = scalar_select 0, %s4, %s2
  loop: start=0, step=1, limit=4
  $region2: #{lambda_shortcut_forward.1} parent=0 // loop_pre_header
    _
  $region3: #{lambda_shortcut_forward.1} parent=0 // loop_header
    %s7 = sphi 0, %s11
    %p8 = scmp.ge.s32.totalorder %s7, 4
    %s17 = sphi 0, %s19
    %s20 = sphi 0, %s17
    %s21 = sphi 0, %s20
    %s37 = sphi 0, %s21
    %s43 = sphi 0, %s45
    %s46 = sphi 0, %s43
    %s47 = sphi 0, %s46
    %s63 = sphi 0, %s47
  $region4: #{lambda_shortcut_forward.1} parent=0 // loop_header_branch
    %10 = sbr.rel (%p8) target = $region8
  $region5: #{lambda_shortcut_forward.1} parent=0 // loop_body
    %s12 = ssub.s32 %s7, 1
    %s13 = ssub.s32 %s7, 2
    %s14 = sadd.s32 %s7, 1
    %s15 = ssub.s32 %s7, %s14
    %p16 = scmp.eq.s32.totalorder %s15, 0
    %s18 = sadd.s32 %s17, 1
    %s19 = scalar_select %p16, %s17, %s18
    %p22 = pneg %p16
    %p23 = scmp.eq.s32.totalorder %s7, 1
    %p24 = por %p22, %p23
    %p25 = scmp.ne.s32.totalorder %s17, %s20
    %p26 = scmp.eq.s32.totalorder %s7, 0
    %p27 = por %p25, %p26
    %p28 = scmp.ne.s32.totalorder %s17, %s20
    %p29 = scmp.eq.s32.totalorder %s12, 1
    %p30 = por %p28, %p29
    %p31 = scmp.ne.s32.totalorder %s20, %s21
    %p32 = scmp.eq.s32.totalorder %s12, 0
    %p33 = por %p31, %p32
    %p34 = scmp.ne.s32.totalorder %s20, %s21
    %p35 = scmp.eq.s32.totalorder %s13, 1
    %p36 = por %p34, %p35
    %p38 = scmp.ne.s32.totalorder %s21, %s37
    %p39 = scmp.eq.s32.totalorder %s13, 0
    %p40 = por %p38, %p39
    %s41 = ssub.s32 %s7, %s14
    %p42 = scmp.eq.s32.totalorder %s41, 0
    %s44 = sadd.s32 %s43, 1
    %s45 = scalar_select %p42, %s43, %s44
    %p48 = pneg %p42
    %p49 = scmp.eq.s32.totalorder %s7, 1
    %p50 = por %p48, %p49
    %p51 = scmp.ne.s32.totalorder %s43, %s46
    %p52 = scmp.eq.s32.totalorder %s7, 0
    %p53 = por %p51, %p52
    %p54 = scmp.ne.s32.totalorder %s43, %s46
    %p55 = scmp.eq.s32.totalorder %s12, 1
    %p56 = por %p54, %p55
    %p57 = scmp.ne.s32.totalorder %s46, %s47
    %p58 = scmp.eq.s32.totalorder %s12, 0
    %p59 = por %p57, %p58
    %p60 = scmp.ne.s32.totalorder %s46, %s47
    %p61 = scmp.eq.s32.totalorder %s13, 1
    %p62 = por %p60, %p61
    %p64 = scmp.ne.s32.totalorder %s47, %s63
    %p65 = scmp.eq.s32.totalorder %s13, 0
    %p66 = por %p64, %p65
    %p67 = scmp.le.s32.totalorder 1, %s7
    %p68 = scmp.lt.s32.totalorder %s7, 3
    %p69 = pnand %p67, %p68
    %p70 = pneg %p69
    // Predicated region
    $region9: #{lambda_shortcut_forward.1} parent=5 // pred_check
      _
    $region10: #{lambda_shortcut_forward.1} parent=5 // pred_check_branch
      %72 = sbr.rel (%p69) target = $region12
    $region11: #{lambda_shortcut_forward.1} parent=5 // pred_region
      %s73 = ssub.s32 %s7, 1
    $region12: #{lambda_shortcut_forward.1} parent=5 // pred_fallthru
      _
    %p74 = scmp.lt.s32.totalorder %s7, 2
    // Predicated region
    $region13: #{lambda_shortcut_forward.1} parent=5 // pred_check
      %p75 = pneg %p74
    $region14: #{lambda_shortcut_forward.1} parent=5 // pred_check_branch
      %77 = sbr.rel (%p75) target = $region16
    $region15: #{lambda_shortcut_forward.1} parent=5 // pred_region
      // Predicated region
      $region17: #{lambda_shortcut_forward.1} parent=15 // pred_check
        %p78 = pneg %p27
      $region18: #{lambda_shortcut_forward.1} parent=15 // pred_check_branch
        %80 = sbr.rel (%p78) target = $region20
      $region19: #{lambda_shortcut_forward.1} parent=15 // pred_region
        %p81 = scmp.lt.s32.totalorder %s7, 1
        %s82 = scalar_select %p81, %s7, 1
        %s83 = smul.addr %s82, 16
        %s84 = smul.addr %s83, 8
        %s85 = scalar_lea.vmem %s0, %s84
      $region20: #{lambda_shortcut_forward.1} parent=15 // pred_fallthru
        _
    $region16: #{lambda_shortcut_forward.1} parent=5 // pred_fallthru
      _
    %p86 = scmp.le.s32.totalorder 1, %s7
    %p87 = scmp.lt.s32.totalorder %s7, 3
    %p88 = pnand %p86, %p87
    %p89 = pneg %p88
    // Predicated region
    $region21: #{lambda_shortcut_forward.1} parent=5 // pred_check
      _
    $region22: #{lambda_shortcut_forward.1} parent=5 // pred_check_branch
      %91 = sbr.rel (%p88) target = $region24
    $region23: #{lambda_shortcut_forward.1} parent=5 // pred_region
      %s92 = ssub.s32 %s7, 1
      %p93 = scmp.lt.s32.totalorder %s12, 1
      %s94 = scalar_select %p93, %s12, 1
      %s95 = smul.addr %s94, 16
      %s96 = smul.addr %s95, 8
      %s97 = scalar_lea.vmem %s0, %s96
      %p98 = pneg %p33
      %p99 = pneg %p30
      %p100 = pneg %p59
      %p101 = pneg %p56
      %p102 = scmp.lt.s32.totalorder %s12, 1
      %s103 = scalar_select %p102, %s12, 1
      %s104 = smul.addr %s103, 32
      %s105 = smul.addr %s104, 8
      %s106 = scalar_lea.vmem %s1, %s105
      %p107 = scmp.lt.s32.totalorder %s12, 1
      %s108 = scalar_select %p107, %s12, 1
      %s109 = smul.addr %s108, 16
      %s110 = smul.addr %s109, 8
      %s111 = scalar_lea.vmem %s0, %s110
      %p112 = scmp.lt.s32.totalorder %s12, 1
      %s113 = scalar_select %p112, %s12, 1
      %s114 = smul.addr %s113, 32
      %s115 = smul.addr %s114, 8
      %s116 = scalar_lea.vmem %s1, %s115
      %v117 = vld [vmem:[%s111] sm:$0xff]
      %v118 = vld [vmem:[%s111 + $0x8] sm:$0xff]
      %v119 = vld [vmem:[%s111 + $0x10] sm:$0xff]
      %v120 = vld [vmem:[%s111 + $0x18] sm:$0xff]
      %v121 = vld [vmem:[%s111 + $0x20] sm:$0xff]
      %v122 = vld [vmem:[%s111 + $0x28] sm:$0xff]
      %v123 = vld [vmem:[%s111 + $0x30] sm:$0xff]
      %v124 = vld [vmem:[%s111 + $0x38] sm:$0xff]
      %v125 = vld [vmem:[%s111 + $0x40] sm:$0xff]
      %v126 = vld [vmem:[%s111 + $0x48] sm:$0xff]
      %v127 = vld [vmem:[%s111 + $0x50] sm:$0xff]
      %v128 = vld [vmem:[%s111 + $0x58] sm:$0xff]
      %v129 = vld [vmem:[%s111 + $0x60] sm:$0xff]
      %v130 = vld [vmem:[%s111 + $0x68] sm:$0xff]
      %v131 = vld [vmem:[%s111 + $0x70] sm:$0xff]
      %v132 = vld [vmem:[%s111 + $0x78] sm:$0xff]
      %v133 = vlaneseq
      %v134 = vshrl.u32 %v133, 7
      %v135 = vadd.s32 %v134, 8
      %v136 = vadd.s32 %v134, 16
      %v137 = vadd.s32 %v134, 24
      %v138 = vlaneseq
      %v139 = vand.u32 %v138, 127
      %v140 = vmul.u32 %v139, 2
      %vm141 = vcmp.eq.s32.totalorder %v134, %v140
      %vm142 = vcmp.eq.s32.totalorder %v135, %v140
      %vm143 = vcmp.eq.s32.totalorder %v136, %v140
      %vm144 = vcmp.eq.s32.totalorder %v137, %v140
      %v145 = vsel %vm141, 1, 0
      %v146 = vsel %vm142, 1, 0
      %v147 = vsel %vm143, 1, 0
      %v148 = vsel %vm144, 1, 0
      %v149 = vcvt.s32.f32 %v145
      %v150 = vcvt.s32.f32 %v146
      %v151 = vcvt.s32.f32 %v147
      %v152 = vcvt.s32.f32 %v148
      %vm153 = vcmask 261120
      %v155 = vsel %vm153, %v117, 0
      %v158 = vsel %vm153, %v118, 0
      %v161 = vsel %vm153, %v119, 0
      %v164 = vsel %vm153, %v120, 0
      %v167 = vsel %vm153, %v121, 0
      %v170 = vsel %vm153, %v122, 0
      %v173 = vsel %vm153, %v123, 0
      %v176 = vsel %vm153, %v124, 0
      %v179 = vsel %vm153, %v125, 0
      %v182 = vsel %vm153, %v126, 0
      %v185 = vsel %vm153, %v127, 0
      %v188 = vsel %vm153, %v128, 0
      %v191 = vsel %vm153, %v129, 0
      %v194 = vsel %vm153, %v130, 0
      %v197 = vsel %vm153, %v131, 0
      %v200 = vsel %vm153, %v132, 0
      %202 = vmatpush.msra.mxu0 0.0
      %203 = vmatpush.msra.mxu0 0.0
      %204 = vmatpush.msra.mxu0 0.0
      %205 = vmatpush.msra.mxu0 0.0
      %206 = vmatpush.msra.mxu0 0.0
      %207 = vmatpush.msra.mxu0 0.0
      %208 = vmatpush.msra.mxu0 0.0
      %209 = vmatpush.msra.mxu0 0.0
      %210 = vmatpush.msra.mxu0 0.0
      %211 = vmatpush.msra.mxu0 0.0
      %212 = vmatpush.msra.mxu0 0.0
      %213 = vmatpush.msra.mxu0 0.0
      %214 = vmatpush.msra.mxu0 %v152
      %215 = vmatpush.msra.mxu0 %v151
      %216 = vmatpush.msra.mxu0 %v150
      %217 = vmatpush.msra.mxu0 %v149
      %218 = vmatmul.f32.gmra.mxu0 %v155
      %v219 = vpop.f32.mrf.mxu0
      %v220 = vadd.f32 0.0, %v219
      %221 = vmatmul.f32.gmra.mxu0 %v158
      %v222 = vpop.f32.mrf.mxu0
      %v223 = vadd.f32 0.0, %v222
      %224 = vmatmul.f32.gmra.mxu0 %v161
      %v225 = vpop.f32.mrf.mxu0
      %v226 = vadd.f32 0.0, %v225
      %227 = vmatmul.f32.gmra.mxu0 %v164
      %v228 = vpop.f32.mrf.mxu0
      %v229 = vadd.f32 0.0, %v228
      %230 = vmatmul.f32.gmra.mxu0 %v167
      %v231 = vpop.f32.mrf.mxu0
      %v232 = vadd.f32 0.0, %v231
      %233 = vmatmul.f32.gmra.mxu0 %v170
      %v234 = vpop.f32.mrf.mxu0
      %v235 = vadd.f32 0.0, %v234
      %236 = vmatmul.f32.gmra.mxu0 %v173
      %v237 = vpop.f32.mrf.mxu0
      %v238 = vadd.f32 0.0, %v237
      %239 = vmatmul.f32.gmra.mxu0 %v176
      %v240 = vpop.f32.mrf.mxu0
      %v241 = vadd.f32 0.0, %v240
      %242 = vmatmul.f32.gmra.mxu0 %v179
      %v243 = vpop.f32.mrf.mxu0
      %v244 = vadd.f32 0.0, %v243
      %245 = vmatmul.f32.gmra.mxu0 %v182
      %v246 = vpop.f32.mrf.mxu0
      %v247 = vadd.f32 0.0, %v246
      %248 = vmatmul.f32.gmra.mxu0 %v185
      %v249 = vpop.f32.mrf.mxu0
      %v250 = vadd.f32 0.0, %v249
      %251 = vmatmul.f32.gmra.mxu0 %v188
      %v252 = vpop.f32.mrf.mxu0
      %v253 = vadd.f32 0.0, %v252
      %254 = vmatmul.f32.gmra.mxu0 %v191
      %v255 = vpop.f32.mrf.mxu0
      %v256 = vadd.f32 0.0, %v255
      %257 = vmatmul.f32.gmra.mxu0 %v194
      %v258 = vpop.f32.mrf.mxu0
      %v259 = vadd.f32 0.0, %v258
      %260 = vmatmul.f32.gmra.mxu0 %v197
      %v261 = vpop.f32.mrf.mxu0
      %v262 = vadd.f32 0.0, %v261
      %263 = vmatmul.f32.gmra.mxu0 %v200
      %v264 = vpop.f32.mrf.mxu0
      %v265 = vadd.f32 0.0, %v264
      %266 = vdwg.mxu0
      %s267 = scalar_lea.vmem %s116, 64
      %vm268 = vcmask 64512
      %269 = vst.msk [vmem:[%s267] sm:$0xff] %vm268, %v220
      %270 = vst.msk [vmem:[%s267 + $0x8] sm:$0xff] %vm268, %v223
      %271 = vst.msk [vmem:[%s267 + $0x10] sm:$0xff] %vm268, %v226
      %272 = vst.msk [vmem:[%s267 + $0x18] sm:$0xff] %vm268, %v229
      %273 = vst.msk [vmem:[%s267 + $0x20] sm:$0xff] %vm268, %v232
      %274 = vst.msk [vmem:[%s267 + $0x28] sm:$0xff] %vm268, %v235
      %275 = vst.msk [vmem:[%s267 + $0x30] sm:$0xff] %vm268, %v238
      %276 = vst.msk [vmem:[%s267 + $0x38] sm:$0xff] %vm268, %v241
      %277 = vst.msk [vmem:[%s267 + $0x40] sm:$0xff] %vm268, %v244
      %278 = vst.msk [vmem:[%s267 + $0x48] sm:$0xff] %vm268, %v247
      %279 = vst.msk [vmem:[%s267 + $0x50] sm:$0xff] %vm268, %v250
      %280 = vst.msk [vmem:[%s267 + $0x58] sm:$0xff] %vm268, %v253
      %281 = vst.msk [vmem:[%s267 + $0x60] sm:$0xff] %vm268, %v256
      %282 = vst.msk [vmem:[%s267 + $0x68] sm:$0xff] %vm268, %v259
      %283 = vst.msk [vmem:[%s267 + $0x70] sm:$0xff] %vm268, %v262
      %284 = vst.msk [vmem:[%s267 + $0x78] sm:$0xff] %vm268, %v265
      %285 = vst.msk [vmem:[%s116] sm:$0xff] %vm268, 0.0
      %286 = vst.msk [vmem:[%s116 + $0x8] sm:$0xff] %vm268, 0.0
      %287 = vst.msk [vmem:[%s116 + $0x10] sm:$0xff] %vm268, 0.0
      %288 = vst.msk [vmem:[%s116 + $0x18] sm:$0xff] %vm268, 0.0
      %289 = vst.msk [vmem:[%s116 + $0x20] sm:$0xff] %vm268, 0.0
      %290 = vst.msk [vmem:[%s116 + $0x28] sm:$0xff] %vm268, 0.0
      %291 = vst.msk [vmem:[%s116 + $0x30] sm:$0xff] %vm268, 0.0
      %292 = vst.msk [vmem:[%s116 + $0x38] sm:$0xff] %vm268, 0.0
      %s293 = scalar_lea.vmem %s116, 192
      %294 = vst.msk [vmem:[%s293] sm:$0xff] %vm268, 0.0
      %295 = vst.msk [vmem:[%s293 + $0x8] sm:$0xff] %vm268, 0.0
      %296 = vst.msk [vmem:[%s293 + $0x10] sm:$0xff] %vm268, 0.0
      %297 = vst.msk [vmem:[%s293 + $0x18] sm:$0xff] %vm268, 0.0
      %298 = vst.msk [vmem:[%s293 + $0x20] sm:$0xff] %vm268, 0.0
      %299 = vst.msk [vmem:[%s293 + $0x28] sm:$0xff] %vm268, 0.0
      %300 = vst.msk [vmem:[%s293 + $0x30] sm:$0xff] %vm268, 0.0
      %301 = vst.msk [vmem:[%s293 + $0x38] sm:$0xff] %vm268, 0.0
      %p302 = scmp.lt.s32.totalorder %s12, 1
      %s303 = scalar_select %p302, %s12, 1
      %s304 = smul.addr %s303, 32
      %s305 = smul.addr %s304, 8
      %s306 = scalar_lea.vmem %s1, %s305
      // Predicated region
      $region25: #{lambda_shortcut_forward.1} parent=23 // pred_check
        %p307 = pneg %p56
      $region26: #{lambda_shortcut_forward.1} parent=23 // pred_check_branch
        %309 = sbr.rel (%p307) target = $region28
      $region27: #{lambda_shortcut_forward.1} parent=23 // pred_region
        _
      $region28: #{lambda_shortcut_forward.1} parent=23 // pred_fallthru
        _
    $region24: #{lambda_shortcut_forward.1} parent=5 // pred_fallthru
      _
    %p310 = scmp.le.s32.totalorder 2, %s7
    // Predicated region
    $region29: #{lambda_shortcut_forward.1} parent=5 // pred_check
      %p311 = pneg %p310
    $region30: #{lambda_shortcut_forward.1} parent=5 // pred_check_branch
      %313 = sbr.rel (%p311) target = $region32
    $region31: #{lambda_shortcut_forward.1} parent=5 // pred_region
      %s314 = ssub.s32 %s7, 2
      // Predicated region
      $region33: #{lambda_shortcut_forward.1} parent=31 // pred_check
        %p315 = pneg %p62
      $region34: #{lambda_shortcut_forward.1} parent=31 // pred_check_branch
        %317 = sbr.rel (%p315) target = $region36
      $region35: #{lambda_shortcut_forward.1} parent=31 // pred_region
        %p318 = scmp.lt.s32.totalorder %s13, 1
        %s319 = scalar_select %p318, %s13, 1
        %s320 = smul.addr %s319, 32
        %s321 = smul.addr %s320, 8
        %s322 = scalar_lea.vmem %s1, %s321
      $region36: #{lambda_shortcut_forward.1} parent=31 // pred_fallthru
        _
    $region32: #{lambda_shortcut_forward.1} parent=5 // pred_fallthru
      _
  $region6: #{lambda_shortcut_forward.1} parent=0 // loop_footer
    %s11 = sadd.s32 1, %s7
  $region7: #{lambda_shortcut_forward.1} parent=0 // loop_footer_branch
    %6 = sbr.rel target = $region3
  $region8: #{lambda_shortcut_forward.1} parent=0 // loop_exit
    _

</llo_original>
